<compile_context>
chip_gen: v6e
topology: v6e:2x2x1
jax: 0.10.0
libtpu: 0.0.40
codegen_flags: <defaults>
</compile_context>

<pallas_src>
import functools

import jax
import jax.numpy as jnp
from jax.experimental import pallas as pl
from jax.experimental.pallas import tpu as pltpu


def dnn_fedsi_kernel(x_ref, w1_ref, b1_ref, w2_ref, b2_ref, out_ref):
    # x tile: (TB, in_dim) bf16. Weights/biases are VMEM-resident across steps.
    x = x_ref[...]

    # fc1 + ReLU: bf16 MXU inputs, f32 accumulation, f32 elementwise (VPU).
    h = jnp.dot(x, w1_ref[...], preferred_element_type=jnp.float32)
    h = jnp.maximum(h + b1_ref[...], 0.0)                     # (TB, mid_p) f32

    # linear head: cast hidden back to bf16 for the MXU, accumulate in f32.
    logits = jnp.dot(h.astype(jnp.bfloat16), w2_ref[...],
                     preferred_element_type=jnp.float32)
    logits = logits + b2_ref[...]                             # (TB, out_dim) f32

    # log_softmax along dim=1 (last axis), max-stabilized, all in f32.
    m = jnp.max(logits, axis=-1, keepdims=True)
    z = logits - m
    lse = jnp.log(jnp.sum(jnp.exp(z), axis=-1, keepdims=True))
    out_ref[...] = (z - lse).astype(out_ref.dtype)


def prepare_params(w1, b1, w2, b2):
    """One-time parameter prep (outside the per-batch forward):
    zero-pad mid_dim up to a multiple of 128 and pre-cast MXU operands to bf16.
    w1: (in_dim, mid_dim), b1: (mid_dim,), w2: (mid_dim, out_dim), b2: (out_dim,)."""
    in_dim, mid_dim = w1.shape
    out_dim = w2.shape[1]
    mid_p = ((mid_dim + 127) // 128) * 128
    w1p = jnp.zeros((in_dim, mid_p), jnp.bfloat16).at[:, :mid_dim].set(
        w1.astype(jnp.bfloat16))
    b1p = jnp.zeros((1, mid_p), jnp.float32).at[:, :mid_dim].set(
        b1.astype(jnp.float32))
    w2p = jnp.zeros((mid_p, out_dim), jnp.bfloat16).at[:mid_dim, :].set(
        w2.astype(jnp.bfloat16))
    b2p = b2.reshape(1, out_dim).astype(jnp.float32)
    return (w1p, b1p, w2p, b2p)


@functools.partial(jax.jit, static_argnames=("block_b",))
def dnn_fedsi_forward(x, params, *, block_b=1024):
    """x: (B, C, H, W) or (B, input_dim); params from prepare_params."""
    w1p, b1p, w2p, b2p = params
    B = x.shape[0]
    x2d = x.reshape(B, -1)                                    # torch.flatten(x, 1)
    in_dim = x2d.shape[1]
    mid_p = w1p.shape[1]
    out_dim = w2p.shape[1]
    assert w1p.shape[0] == in_dim, "w1 in_features mismatch with flattened x"

    # --- Batch tiling: tile must be a multiple of 8 sublanes; pad B up to it.
    tb = min(block_b, max(8, ((B + 7) // 8) * 8))
    tb = ((tb + 7) // 8) * 8
    Bp = ((B + tb - 1) // tb) * tb
    if Bp == B:
        xp = x2d.astype(jnp.bfloat16)
    else:
        xp = jnp.zeros((Bp, in_dim), jnp.bfloat16).at[:B, :].set(
            x2d.astype(jnp.bfloat16))

    grid = (Bp // tb,)
    out = pl.pallas_call(
        dnn_fedsi_kernel,
        out_shape=jax.ShapeDtypeStruct((Bp, out_dim), jnp.float32),
        grid=grid,
        in_specs=[
            pl.BlockSpec((tb, in_dim), lambda i: (i, 0)),       # x: batch tile
            pl.BlockSpec((in_dim, mid_p), lambda i: (0, 0)),    # w1: resident
            pl.BlockSpec((1, mid_p), lambda i: (0, 0)),         # b1: resident
            pl.BlockSpec((mid_p, out_dim), lambda i: (0, 0)),   # w2: resident
            pl.BlockSpec((1, out_dim), lambda i: (0, 0)),       # b2: resident
        ],
        out_specs=pl.BlockSpec((tb, out_dim), lambda i: (i, 0)),
        compiler_params=pltpu.CompilerParams(
            dimension_semantics=("parallel",),                  # megacore on v7x
            vmem_limit_bytes=32 * 1024 * 1024,                  # safe on v5e/v6e/v7x
        ),
        cost_estimate=pl.CostEstimate(
            flops=2 * Bp * (in_dim * mid_p + mid_p * out_dim),
            transcendentals=Bp * (out_dim + 1),
            bytes_accessed=(Bp * in_dim * 2 + w1p.size * 2 + w2p.size * 2
                            + b1p.size * 4 + b2p.size * 4 + Bp * out_dim * 4),
        ),
    )(xp, w1p, b1p, w2p, b2p)
    return out[:B] if Bp != B else out


def init_params(key, input_dim=784, mid_dim=100, output_dim=10):
    """Deterministic PyTorch-style uniform(-1/sqrt(fan_in), 1/sqrt(fan_in)) init.
    Weights stored already transposed: (in_features, out_features)."""
    k1, k2, k3, k4 = jax.random.split(key, 4)
    bound1 = 1.0 / jnp.sqrt(jnp.float32(input_dim))
    bound2 = 1.0 / jnp.sqrt(jnp.float32(mid_dim))
    w1 = jax.random.uniform(k1, (input_dim, mid_dim), jnp.float32, -bound1, bound1)
    b1 = jax.random.uniform(k2, (mid_dim,), jnp.float32, -bound1, bound1)
    w2 = jax.random.uniform(k3, (mid_dim, output_dim), jnp.float32, -bound2, bound2)
    b2 = jax.random.uniform(k4, (output_dim,), jnp.float32, -bound2, bound2)
    return w1, b1, w2, b2


if __name__ == "__main__":
    key = jax.random.PRNGKey(0)
    kx, kp = jax.random.split(key)

    # Small MNIST-like input: batch=2, NCHW (2, 1, 28, 28) -> flatten to (2, 784).
    # (Pallas path pays off at large B; at B=2 this mainly exercises correctness.)
    x = jax.random.normal(kx, (2, 1, 28, 28), dtype=jnp.float32)
    w1, b1, w2, b2 = init_params(kp, input_dim=784, mid_dim=100, output_dim=10)
    params = prepare_params(w1, b1, w2, b2)       # one-time: pad mid_dim, cast bf16

    out = dnn_fedsi_forward(x, params)
    out = jax.block_until_ready(out)
    assert out.shape == (2, 10)

    # Pure-JAX reference with matching bf16 rounding (tight check).
    x2d = x.reshape(2, -1)
    xb = x2d.astype(jnp.bfloat16).astype(jnp.float32)
    w1b = w1.astype(jnp.bfloat16).astype(jnp.float32)
    w2b = w2.astype(jnp.bfloat16).astype(jnp.float32)
    h = jnp.maximum(xb @ w1b + b1, 0.0)
    hb = h.astype(jnp.bfloat16).astype(jnp.float32)
    ref_bf16 = jax.nn.log_softmax(hb @ w2b + b2, axis=1)
    assert jnp.allclose(out, ref_bf16, atol=1e-3, rtol=1e-3)

    # Full-f32 PyTorch-equivalent reference (loose check: bf16 input rounding).
    ref_f32 = jax.nn.log_softmax(jnp.maximum(x2d @ w1 + b1, 0.0) @ w2 + b2, axis=1)
    assert jnp.allclose(out, ref_f32, atol=5e-2, rtol=5e-2)

    print("KERNEL_OK")
</pallas_src>

<mosaic_0001>
module attributes {stable_mosaic.version = 11 : i64} {
  func.func @dnn_fedsi_kernel(%arg0: i32, %arg1: memref<8x784xbf16, #tpu.memory_space<vmem>>, %arg2: memref<784x128xbf16, #tpu.memory_space<vmem>>, %arg3: memref<1x128xf32, #tpu.memory_space<vmem>>, %arg4: memref<128x10xbf16, #tpu.memory_space<vmem>>, %arg5: memref<1x10xf32, #tpu.memory_space<vmem>>, %arg6: memref<8x10xf32, #tpu.memory_space<vmem>>) attributes {dimension_semantics = [#tpu.dimension_semantics<parallel>], iteration_bounds = array<i64: 1>, scalar_prefetch = 0 : i64, scratch_operands = 0 : i64, tpu.core_type = #tpu.core_type<tc>, window_params = [{transform_indices = @transform_0, window_bounds = array<i64: 8, 784>}, {pipeline_mode = #tpu.pipeline_mode<synchronous>, transform_indices = @transform_1, window_bounds = array<i64: 784, 128>}, {pipeline_mode = #tpu.pipeline_mode<synchronous>, transform_indices = @transform_2, window_bounds = array<i64: 1, 128>}, {pipeline_mode = #tpu.pipeline_mode<synchronous>, transform_indices = @transform_3, window_bounds = array<i64: 128, 10>}, {pipeline_mode = #tpu.pipeline_mode<synchronous>, transform_indices = @transform_4, window_bounds = array<i64: 1, 10>}, {transform_indices = @transform_5, window_bounds = array<i64: 8, 10>}]} {
    %c0 = arith.constant 0 : index
    %c0_0 = arith.constant 0 : index
    %0 = vector.load %arg1[%c0, %c0_0] : memref<8x784xbf16, #tpu.memory_space<vmem>>, vector<8x784xbf16>
    %c0_1 = arith.constant 0 : index
    %c0_2 = arith.constant 0 : index
    %1 = vector.load %arg2[%c0_1, %c0_2] : memref<784x128xbf16, #tpu.memory_space<vmem>>, vector<784x128xbf16>
    %cst = arith.constant dense<0.000000e+00> : vector<8x128xf32>
    %2 = tpu.matmul %0, %1, %cst {dimension_numbers = #tpu.dot_dimension_numbers<[1], [0], [0], [1], [0, 0, 1, 1], [], []>} : vector<8x784xbf16>, vector<784x128xbf16>, vector<8x128xf32> -> vector<8x128xf32>
    %c0_3 = arith.constant 0 : index
    %c0_4 = arith.constant 0 : index
    %3 = vector.load %arg3[%c0_3, %c0_4] : memref<1x128xf32, #tpu.memory_space<vmem>>, vector<1x128xf32>
    %4 = vector.broadcast %3 : vector<1x128xf32> to vector<8x128xf32>
    %5 = arith.addf %2, %4 : vector<8x128xf32>
    %cst_5 = arith.constant 0.000000e+00 : f32
    %6 = vector.broadcast %cst_5 : f32 to vector<8x128xf32>
    %7 = arith.maximumf %5, %6 : vector<8x128xf32>
    %8 = arith.truncf %7 : vector<8x128xf32> to vector<8x128xbf16>
    %c0_6 = arith.constant 0 : index
    %c0_7 = arith.constant 0 : index
    %9 = vector.load %arg4[%c0_6, %c0_7] : memref<128x10xbf16, #tpu.memory_space<vmem>>, vector<128x10xbf16>
    %cst_8 = arith.constant dense<0.000000e+00> : vector<8x10xf32>
    %10 = tpu.matmul %8, %9, %cst_8 {dimension_numbers = #tpu.dot_dimension_numbers<[1], [0], [0], [1], [0, 0, 1, 1], [], []>} : vector<8x128xbf16>, vector<128x10xbf16>, vector<8x10xf32> -> vector<8x10xf32>
    %c0_9 = arith.constant 0 : index
    %c0_10 = arith.constant 0 : index
    %11 = vector.load %arg5[%c0_9, %c0_10] : memref<1x10xf32, #tpu.memory_space<vmem>>, vector<1x10xf32>
    %12 = vector.broadcast %11 : vector<1x10xf32> to vector<8x10xf32>
    %13 = arith.addf %10, %12 : vector<8x10xf32>
    %cst_11 = arith.constant dense<0xFF800000> : vector<8xf32>
    %14 = vector.multi_reduction <maximumf>, %13, %cst_11 [1] : vector<8x10xf32> to vector<8xf32>
    %15 = vector.shape_cast %14 : vector<8xf32> to vector<8x1xf32>
    %16 = vector.broadcast %15 : vector<8x1xf32> to vector<8x10xf32>
    %17 = arith.subf %13, %16 : vector<8x10xf32>
    %18 = math.exp %17 : vector<8x10xf32>
    %cst_12 = arith.constant dense<0.000000e+00> : vector<8xf32>
    %19 = vector.multi_reduction <add>, %18, %cst_12 [1] : vector<8x10xf32> to vector<8xf32>
    %20 = vector.shape_cast %19 : vector<8xf32> to vector<8x1xf32>
    %21 = math.log %20 : vector<8x1xf32>
    %22 = vector.broadcast %21 : vector<8x1xf32> to vector<8x10xf32>
    %23 = arith.subf %17, %22 : vector<8x10xf32>
    %c0_13 = arith.constant 0 : index
    %c0_14 = arith.constant 0 : index
    %24 = vector.load %arg6[%c0_13, %c0_14] : memref<8x10xf32, #tpu.memory_space<vmem>>, vector<8x10xf32>
    tpu.vector_store %arg6[%c0_13, %c0_14], %23 {strides = array<i32>} : memref<8x10xf32, #tpu.memory_space<vmem>>, vector<8x10xf32>,
    return
  }
  func.func @transform_0(%arg0: i32) -> (i32, i32) {
    %c0_i32 = arith.constant 0 : i32
    %c0_i32_0 = arith.constant 0 : i32
    return %arg0, %c0_i32 : i32, i32
  }
  func.func @transform_1(%arg0: i32) -> (i32, i32) {
    %c0_i32 = arith.constant 0 : i32
    %c0_i32_0 = arith.constant 0 : i32
    %c0_i32_1 = arith.constant 0 : i32
    return %c0_i32, %c0_i32_0 : i32, i32
  }
  func.func @transform_2(%arg0: i32) -> (i32, i32) {
    %c0_i32 = arith.constant 0 : i32
    %c0_i32_0 = arith.constant 0 : i32
    %c0_i32_1 = arith.constant 0 : i32
    return %c0_i32, %c0_i32_0 : i32, i32
  }
  func.func @transform_3(%arg0: i32) -> (i32, i32) {
    %c0_i32 = arith.constant 0 : i32
    %c0_i32_0 = arith.constant 0 : i32
    %c0_i32_1 = arith.constant 0 : i32
    return %c0_i32, %c0_i32_0 : i32, i32
  }
  func.func @transform_4(%arg0: i32) -> (i32, i32) {
    %c0_i32 = arith.constant 0 : i32
    %c0_i32_0 = arith.constant 0 : i32
    %c0_i32_1 = arith.constant 0 : i32
    return %c0_i32, %c0_i32_0 : i32, i32
  }
  func.func @transform_5(%arg0: i32) -> (i32, i32) {
    %c0_i32 = arith.constant 0 : i32
    %c0_i32_0 = arith.constant 0 : i32
    return %arg0, %c0_i32 : i32, i32
  }
}

</mosaic_0001>

<llo_original>
// kernel: dnn_fedsi_forward.1
$region0: #{dnn_fedsi_forward.1}
  #allocation0 [shape = 'u32[]', space=smem, size = 0x4, offset = 0x4, fixed_abs, tag = 'smem constant byte address 0x4 - core index']
  #allocation1 [shape = 'u32[144,128]{1,0:T(1,128)}', space=vmem, size = 0x12000, scoped, tag = 'internal scratch']
  %s0 = inlined_call_operand.vmem [shape: bf16[8,784], index: 0, kind: input, shape index: {}]
  %s1 = inlined_call_operand.hbm [shape: bf16[784,128], index: 1, kind: input, shape index: {}]
  %s2 = inlined_call_operand.vmem [shape: f32[1,128], index: 2, kind: input, shape index: {}]
  %s3 = inlined_call_operand.vmem [shape: bf16[128,10], index: 3, kind: input, shape index: {}]
  %s4 = inlined_call_operand.vmem [shape: f32[1,10], index: 4, kind: input, shape index: {}]
  %s5 = inlined_call_operand.vmem [shape: f32[8,10], index: 5, kind: output, shape index: {}]
  %s6 = sld [smem:[#allocation0]]
  $region34: #{dnn_fedsi_forward.1} parent=0
    _
  %s8 = ssub.s32 1, %s6
  %s9 = scalar_select 0, %s8, %s6
  $region1: #{dnn_fedsi_forward.1} parent=0
    #allocation2 [shape = 'u8[200704]{0}', space=vmem, size = 0x31000, scoped, tag = 'input window, operand 1, single buffered']
    #allocation3 [shape = 's32[1]{0}', space=sflag, size = 0x4, scoped, tag = 'scoped memory for dnn_fedsi_forward.1']
    %10 = vsyncpa [#allocation3], 0
    // Predicated region
    $region2: #{dnn_fedsi_forward.1} parent=1 // pred_check
      _
    $region3: #{dnn_fedsi_forward.1} parent=1 // pred_check_branch
      %12 = sbr.rel (0) target = $region5
    $region4: #{dnn_fedsi_forward.1} parent=1 // pred_region
      _
    $region5: #{dnn_fedsi_forward.1} parent=1 // pred_fallthru
      _
    // Predicated region
    $region6: #{dnn_fedsi_forward.1} parent=1 // pred_check
      _
    $region7: #{dnn_fedsi_forward.1} parent=1 // pred_check_branch
      %14 = sbr.rel (0) target = $region9
    $region8: #{dnn_fedsi_forward.1} parent=1 // pred_region
      %s16 = ssub.s32 6272, 6272
      %17 = vsyncadd [#allocation3], %s16
      %s18 = sshll.u32 [#allocation2], 4
      %s19 = int_to_ptr.vmem [resolvable:$true] %s18
      %24 = dma.hbm_to_vmem [thread:$0]  %s1, 6272, %s19, [#allocation3], 64, 64, 4
    $region9: #{dnn_fedsi_forward.1} parent=1 // pred_fallthru
      _
    // Predicated region
    $region10: #{dnn_fedsi_forward.1} parent=1 // pred_check
      _
    $region11: #{dnn_fedsi_forward.1} parent=1 // pred_check_branch
      %26 = sbr.rel (0) target = $region13
    $region12: #{dnn_fedsi_forward.1} parent=1 // pred_region
      _
    $region13: #{dnn_fedsi_forward.1} parent=1 // pred_fallthru
      _
    // Predicated region
    $region14: #{dnn_fedsi_forward.1} parent=1 // pred_check
      _
    $region15: #{dnn_fedsi_forward.1} parent=1 // pred_check_branch
      %28 = sbr.rel (0) target = $region17
    $region16: #{dnn_fedsi_forward.1} parent=1 // pred_region
      _
    $region17: #{dnn_fedsi_forward.1} parent=1 // pred_fallthru
      _
    // Predicated region
    $region18: #{dnn_fedsi_forward.1} parent=1 // pred_check
      _
    $region19: #{dnn_fedsi_forward.1} parent=1 // pred_check_branch
      %30 = sbr.rel (0) target = $region21
    $region20: #{dnn_fedsi_forward.1} parent=1 // pred_region
      _
    $region21: #{dnn_fedsi_forward.1} parent=1 // pred_fallthru
      _
    // Predicated region
    $region22: #{dnn_fedsi_forward.1} parent=1 // pred_check
      _
    $region23: #{dnn_fedsi_forward.1} parent=1 // pred_check_branch
      %32 = sbr.rel (0) target = $region25
    $region24: #{dnn_fedsi_forward.1} parent=1 // pred_region
      %33 = dma.done [#allocation3], 6272
    $region25: #{dnn_fedsi_forward.1} parent=1 // pred_fallthru
      _
    %v35 = vld [vmem:[%s0] sm:$0xff]
    %v36 = vld [vmem:[%s0 + $0x8] sm:$0xff]
    %v37 = vld [vmem:[%s0 + $0x10] sm:$0xff]
    %v38 = vld [vmem:[%s0 + $0x18] sm:$0xf]
    %v39 = vld [vmem:[#allocation2] sm:$0xf]
    %v40 = vld [vmem:[#allocation2 + $0x4] sm:$0xf]
    %v41 = vld [vmem:[#allocation2 + $0x8] sm:$0xf]
    %v42 = vld [vmem:[#allocation2 + $0xc] sm:$0xf]
    %v43 = vld [vmem:[#allocation2 + $0x10] sm:$0xf]
    %v44 = vld [vmem:[#allocation2 + $0x14] sm:$0xf]
    %v45 = vld [vmem:[#allocation2 + $0x18] sm:$0xf]
    %v46 = vld [vmem:[#allocation2 + $0x1c] sm:$0xf]
    %v47 = vld [vmem:[#allocation2 + $0x20] sm:$0xf]
    %v48 = vld [vmem:[#allocation2 + $0x24] sm:$0xf]
    %v49 = vld [vmem:[#allocation2 + $0x28] sm:$0xf]
    %v50 = vld [vmem:[#allocation2 + $0x2c] sm:$0xf]
    %v51 = vld [vmem:[#allocation2 + $0x30] sm:$0xf]
    %v52 = vld [vmem:[#allocation2 + $0x34] sm:$0xf]
    %v53 = vld [vmem:[#allocation2 + $0x38] sm:$0xf]
    %v54 = vld [vmem:[#allocation2 + $0x3c] sm:$0xf]
    %v55 = vld [vmem:[#allocation2 + $0x40] sm:$0xf]
    %v56 = vld [vmem:[#allocation2 + $0x44] sm:$0xf]
    %v57 = vld [vmem:[#allocation2 + $0x48] sm:$0xf]
    %v58 = vld [vmem:[#allocation2 + $0x4c] sm:$0xf]
    %v59 = vld [vmem:[#allocation2 + $0x50] sm:$0xf]
    %v60 = vld [vmem:[#allocation2 + $0x54] sm:$0xf]
    %v61 = vld [vmem:[#allocation2 + $0x58] sm:$0xf]
    %v62 = vld [vmem:[#allocation2 + $0x5c] sm:$0xf]
    %v63 = vld [vmem:[#allocation2 + $0x60] sm:$0xf]
    %v64 = vld [vmem:[#allocation2 + $0x64] sm:$0xf]
    %v65 = vld [vmem:[#allocation2 + $0x68] sm:$0xf]
    %v66 = vld [vmem:[#allocation2 + $0x6c] sm:$0xf]
    %v67 = vld [vmem:[#allocation2 + $0x70] sm:$0xf]
    %v68 = vld [vmem:[#allocation2 + $0x74] sm:$0xf]
    %v69 = vld [vmem:[#allocation2 + $0x78] sm:$0xf]
    %v70 = vld [vmem:[#allocation2 + $0x7c] sm:$0xf]
    %v71 = vld [vmem:[#allocation2 + $0x80] sm:$0xf]
    %v72 = vld [vmem:[#allocation2 + $0x84] sm:$0xf]
    %v73 = vld [vmem:[#allocation2 + $0x88] sm:$0xf]
    %v74 = vld [vmem:[#allocation2 + $0x8c] sm:$0xf]
    %v75 = vld [vmem:[#allocation2 + $0x90] sm:$0xf]
    %v76 = vld [vmem:[#allocation2 + $0x94] sm:$0xf]
    %v77 = vld [vmem:[#allocation2 + $0x98] sm:$0xf]
    %v78 = vld [vmem:[#allocation2 + $0x9c] sm:$0xf]
    %v79 = vld [vmem:[#allocation2 + $0xa0] sm:$0xf]
    %v80 = vld [vmem:[#allocation2 + $0xa4] sm:$0xf]
    %v81 = vld [vmem:[#allocation2 + $0xa8] sm:$0xf]
    %v82 = vld [vmem:[#allocation2 + $0xac] sm:$0xf]
    %v83 = vld [vmem:[#allocation2 + $0xb0] sm:$0xf]
    %v84 = vld [vmem:[#allocation2 + $0xb4] sm:$0xf]
    %v85 = vld [vmem:[#allocation2 + $0xb8] sm:$0xf]
    %v86 = vld [vmem:[#allocation2 + $0xbc] sm:$0xf]
    %v87 = vld [vmem:[#allocation2 + $0xc0] sm:$0xf]
    %v88 = vld [vmem:[#allocation2 + $0xc4] sm:$0xf]
    %v89 = vld [vmem:[#allocation2 + $0xc8] sm:$0xf]
    %v90 = vld [vmem:[#allocation2 + $0xcc] sm:$0xf]
    %v91 = vld [vmem:[#allocation2 + $0xd0] sm:$0xf]
    %v92 = vld [vmem:[#allocation2 + $0xd4] sm:$0xf]
    %v93 = vld [vmem:[#allocation2 + $0xd8] sm:$0xf]
    %v94 = vld [vmem:[#allocation2 + $0xdc] sm:$0xf]
    %v95 = vld [vmem:[#allocation2 + $0xe0] sm:$0xf]
    %v96 = vld [vmem:[#allocation2 + $0xe4] sm:$0xf]
    %v97 = vld [vmem:[#allocation2 + $0xe8] sm:$0xf]
    %v98 = vld [vmem:[#allocation2 + $0xec] sm:$0xf]
    %v99 = vld [vmem:[#allocation2 + $0xf0] sm:$0xf]
    %v100 = vld [vmem:[#allocation2 + $0xf4] sm:$0xf]
    %v101 = vld [vmem:[#allocation2 + $0xf8] sm:$0xf]
    %v102 = vld [vmem:[#allocation2 + $0xfc] sm:$0xf]
    %v103 = vld [vmem:[#allocation2 + $0x100] sm:$0xf]
    %v104 = vld [vmem:[#allocation2 + $0x104] sm:$0xf]
    %v105 = vld [vmem:[#allocation2 + $0x108] sm:$0xf]
    %v106 = vld [vmem:[#allocation2 + $0x10c] sm:$0xf]
    %v107 = vld [vmem:[#allocation2 + $0x110] sm:$0xf]
    %v108 = vld [vmem:[#allocation2 + $0x114] sm:$0xf]
    %v109 = vld [vmem:[#allocation2 + $0x118] sm:$0xf]
    %v110 = vld [vmem:[#allocation2 + $0x11c] sm:$0xf]
    %v111 = vld [vmem:[#allocation2 + $0x120] sm:$0xf]
    %v112 = vld [vmem:[#allocation2 + $0x124] sm:$0xf]
    %v113 = vld [vmem:[#allocation2 + $0x128] sm:$0xf]
    %v114 = vld [vmem:[#allocation2 + $0x12c] sm:$0xf]
    %v115 = vld [vmem:[#allocation2 + $0x130] sm:$0xf]
    %v116 = vld [vmem:[#allocation2 + $0x134] sm:$0xf]
    %v117 = vld [vmem:[#allocation2 + $0x138] sm:$0xf]
    %v118 = vld [vmem:[#allocation2 + $0x13c] sm:$0xf]
    %v119 = vld [vmem:[#allocation2 + $0x140] sm:$0xf]
    %v120 = vld [vmem:[#allocation2 + $0x144] sm:$0xf]
    %v121 = vld [vmem:[#allocation2 + $0x148] sm:$0xf]
    %v122 = vld [vmem:[#allocation2 + $0x14c] sm:$0xf]
    %v123 = vld [vmem:[#allocation2 + $0x150] sm:$0xf]
    %v124 = vld [vmem:[#allocation2 + $0x154] sm:$0xf]
    %v125 = vld [vmem:[#allocation2 + $0x158] sm:$0xf]
    %v126 = vld [vmem:[#allocation2 + $0x15c] sm:$0xf]
    %v127 = vld [vmem:[#allocation2 + $0x160] sm:$0xf]
    %v128 = vld [vmem:[#allocation2 + $0x164] sm:$0xf]
    %v129 = vld [vmem:[#allocation2 + $0x168] sm:$0xf]
    %v130 = vld [vmem:[#allocation2 + $0x16c] sm:$0xf]
    %v131 = vld [vmem:[#allocation2 + $0x170] sm:$0xf]
    %v132 = vld [vmem:[#allocation2 + $0x174] sm:$0xf]
    %v133 = vld [vmem:[#allocation2 + $0x178] sm:$0xf]
    %v134 = vld [vmem:[#allocation2 + $0x17c] sm:$0xf]
    %v135 = vld [vmem:[#allocation2 + $0x180] sm:$0xf]
    %v136 = vld [vmem:[#allocation2 + $0x184] sm:$0xf]
    %v137 = vld [vmem:[%s2] sm:$0x1]
    %v139 = vlaneseq
    %v140 = vshrl.u32 %v139, 7
    %v141 = vsub.s32 0, %v140
    %v142 = vrot.slane %v137, %v141
    %v148 = vunpack.c.l.b16 %v35
    %v149 = vunpack.c.h.b16 %v35
    %v150 = vunpack.c.l.b16 %v36
    %v151 = vunpack.c.h.b16 %v36
    %v152 = vunpack.c.l.b16 %v37
    %v153 = vunpack.c.h.b16 %v37
    %v154 = vunpack.c.l.b16 %v38
    %v155 = vpack.c.b16 %v148, %v148
    %v156 = vpack.c.b16 %v149, %v149
    %v157 = vpack.c.b16 %v150, %v150
    %v158 = vpack.c.b16 %v151, %v151
    %v159 = vpack.c.b16 %v152, %v152
    %v160 = vpack.c.b16 %v153, %v153
    %v161 = vpack.c.b16 %v154, %v154
    %v266 = vunpack.c.l.b16 %v39
    %v267 = vunpack.c.l.b16 %v40
    %v268 = vunpack.c.l.b16 %v41
    %v269 = vunpack.c.l.b16 %v42
    %v270 = vunpack.c.l.b16 %v43
    %v271 = vunpack.c.l.b16 %v44
    %v272 = vunpack.c.l.b16 %v45
    %v273 = vunpack.c.l.b16 %v46
    %v274 = vunpack.c.l.b16 %v47
    %v275 = vunpack.c.l.b16 %v48
    %v276 = vunpack.c.l.b16 %v49
    %v277 = vunpack.c.l.b16 %v50
    %v278 = vunpack.c.l.b16 %v51
    %v279 = vunpack.c.l.b16 %v52
    %v280 = vunpack.c.l.b16 %v53
    %v281 = vunpack.c.l.b16 %v54
    %v282 = vunpack.c.l.b16 %v55
    %v283 = vunpack.c.l.b16 %v56
    %v284 = vunpack.c.l.b16 %v57
    %v285 = vunpack.c.l.b16 %v58
    %v286 = vunpack.c.l.b16 %v59
    %v287 = vunpack.c.l.b16 %v60
    %v288 = vunpack.c.l.b16 %v61
    %v289 = vunpack.c.l.b16 %v62
    %v290 = vunpack.c.l.b16 %v63
    %v291 = vunpack.c.l.b16 %v64
    %v292 = vunpack.c.l.b16 %v65
    %v293 = vunpack.c.l.b16 %v66
    %v294 = vunpack.c.l.b16 %v67
    %v295 = vunpack.c.l.b16 %v68
    %v296 = vunpack.c.l.b16 %v69
    %v297 = vunpack.c.l.b16 %v70
    %v298 = vunpack.c.l.b16 %v71
    %v299 = vunpack.c.l.b16 %v72
    %v300 = vunpack.c.l.b16 %v73
    %v301 = vunpack.c.l.b16 %v74
    %v302 = vunpack.c.l.b16 %v75
    %v303 = vunpack.c.l.b16 %v76
    %v304 = vunpack.c.l.b16 %v77
    %v305 = vunpack.c.l.b16 %v78
    %v306 = vunpack.c.l.b16 %v79
    %v307 = vunpack.c.l.b16 %v80
    %v308 = vunpack.c.l.b16 %v81
    %v309 = vunpack.c.l.b16 %v82
    %v310 = vunpack.c.l.b16 %v83
    %v311 = vunpack.c.l.b16 %v84
    %v312 = vunpack.c.l.b16 %v85
    %v313 = vunpack.c.l.b16 %v86
    %v314 = vunpack.c.l.b16 %v87
    %v315 = vunpack.c.l.b16 %v88
    %v316 = vunpack.c.l.b16 %v89
    %v317 = vunpack.c.l.b16 %v90
    %v318 = vunpack.c.l.b16 %v91
    %v319 = vunpack.c.l.b16 %v92
    %v320 = vunpack.c.l.b16 %v93
    %v321 = vunpack.c.l.b16 %v94
    %v322 = vunpack.c.l.b16 %v95
    %v323 = vunpack.c.l.b16 %v96
    %v324 = vunpack.c.l.b16 %v97
    %v325 = vunpack.c.l.b16 %v98
    %v326 = vunpack.c.l.b16 %v99
    %v327 = vunpack.c.l.b16 %v100
    %v328 = vunpack.c.l.b16 %v101
    %v329 = vunpack.c.l.b16 %v102
    %v330 = vunpack.c.l.b16 %v103
    %v331 = vunpack.c.l.b16 %v104
    %v332 = vunpack.c.l.b16 %v105
    %v333 = vunpack.c.l.b16 %v106
    %v334 = vunpack.c.l.b16 %v107
    %v335 = vunpack.c.l.b16 %v108
    %v336 = vunpack.c.l.b16 %v109
    %v337 = vunpack.c.l.b16 %v110
    %v338 = vunpack.c.l.b16 %v111
    %v339 = vunpack.c.l.b16 %v112
    %v340 = vunpack.c.l.b16 %v113
    %v341 = vunpack.c.l.b16 %v114
    %v342 = vunpack.c.l.b16 %v115
    %v343 = vunpack.c.l.b16 %v116
    %v344 = vunpack.c.l.b16 %v117
    %v345 = vunpack.c.l.b16 %v118
    %v346 = vunpack.c.l.b16 %v119
    %v347 = vunpack.c.l.b16 %v120
    %v348 = vunpack.c.l.b16 %v121
    %v349 = vunpack.c.l.b16 %v122
    %v350 = vunpack.c.l.b16 %v123
    %v351 = vunpack.c.l.b16 %v124
    %v352 = vunpack.c.l.b16 %v125
    %v353 = vunpack.c.l.b16 %v126
    %v354 = vunpack.c.l.b16 %v127
    %v355 = vunpack.c.l.b16 %v128
    %v356 = vunpack.c.l.b16 %v129
    %v357 = vunpack.c.l.b16 %v130
    %v358 = vunpack.c.l.b16 %v131
    %v359 = vunpack.c.l.b16 %v132
    %v360 = vunpack.c.l.b16 %v133
    %v361 = vunpack.c.l.b16 %v134
    %v362 = vunpack.c.l.b16 %v135
    %v363 = vunpack.c.l.b16 %v136
    %v364 = vpack.c.b16 %v267, %v266
    %v365 = vpack.c.b16 %v269, %v268
    %v366 = vpack.c.b16 %v271, %v270
    %v367 = vpack.c.b16 %v273, %v272
    %v368 = vpack.c.b16 %v275, %v274
    %v369 = vpack.c.b16 %v277, %v276
    %v370 = vpack.c.b16 %v279, %v278
    %v371 = vpack.c.b16 %v281, %v280
    %v372 = vpack.c.b16 %v283, %v282
    %v373 = vpack.c.b16 %v285, %v284
    %v374 = vpack.c.b16 %v287, %v286
    %v375 = vpack.c.b16 %v289, %v288
    %v376 = vpack.c.b16 %v291, %v290
    %v377 = vpack.c.b16 %v293, %v292
    %v378 = vpack.c.b16 %v295, %v294
    %v379 = vpack.c.b16 %v297, %v296
    %v380 = vpack.c.b16 %v299, %v298
    %v381 = vpack.c.b16 %v301, %v300
    %v382 = vpack.c.b16 %v303, %v302
    %v383 = vpack.c.b16 %v305, %v304
    %v384 = vpack.c.b16 %v307, %v306
    %v385 = vpack.c.b16 %v309, %v308
    %v386 = vpack.c.b16 %v311, %v310
    %v387 = vpack.c.b16 %v313, %v312
    %v388 = vpack.c.b16 %v315, %v314
    %v389 = vpack.c.b16 %v317, %v316
    %v390 = vpack.c.b16 %v319, %v318
    %v391 = vpack.c.b16 %v321, %v320
    %v392 = vpack.c.b16 %v323, %v322
    %v393 = vpack.c.b16 %v325, %v324
    %v394 = vpack.c.b16 %v327, %v326
    %v395 = vpack.c.b16 %v329, %v328
    %v396 = vpack.c.b16 %v331, %v330
    %v397 = vpack.c.b16 %v333, %v332
    %v398 = vpack.c.b16 %v335, %v334
    %v399 = vpack.c.b16 %v337, %v336
    %v400 = vpack.c.b16 %v339, %v338
    %v401 = vpack.c.b16 %v341, %v340
    %v402 = vpack.c.b16 %v343, %v342
    %v403 = vpack.c.b16 %v345, %v344
    %v404 = vpack.c.b16 %v347, %v346
    %v405 = vpack.c.b16 %v349, %v348
    %v406 = vpack.c.b16 %v351, %v350
    %v407 = vpack.c.b16 %v353, %v352
    %v408 = vpack.c.b16 %v355, %v354
    %v409 = vpack.c.b16 %v357, %v356
    %v410 = vpack.c.b16 %v359, %v358
    %v411 = vpack.c.b16 %v361, %v360
    %v412 = vpack.c.b16 %v363, %v362
    %vm462 = vcmask 130048
    %v464 = vsel %vm462, %v161, 0
    %466 = vmatprep.subr.bf16.mxu0 0
    %467 = vmatpush1.bf16.msra.mxu0 %v371
    %468 = vmatprep.subr.bf16.mxu0 0
    %469 = vmatpush1.bf16.msra.mxu0 %v370
    %470 = vmatprep.subr.bf16.mxu0 0
    %471 = vmatpush1.bf16.msra.mxu0 %v369
    %472 = vmatprep.subr.bf16.mxu0 0
    %473 = vmatpush1.bf16.msra.mxu0 %v368
    %474 = vmatprep.subr.bf16.mxu0 0
    %475 = vmatpush1.bf16.msra.mxu0 %v367
    %476 = vmatprep.subr.bf16.mxu0 0
    %477 = vmatpush1.bf16.msra.mxu0 %v366
    %478 = vmatprep.subr.bf16.mxu0 0
    %479 = vmatpush1.bf16.msra.mxu0 %v365
    %480 = vmatprep.subr.bf16.mxu0 0
    %481 = vmatpush1.bf16.msra.mxu0 %v364
    %482 = vmatprep.subr.bf16.mxu0 0
    %483 = vmatpush2.bf16.msra.mxu0 %v379
    %484 = vmatprep.subr.bf16.mxu0 0
    %485 = vmatpush2.bf16.msra.mxu0 %v378
    %486 = vmatprep.subr.bf16.mxu0 0
    %487 = vmatpush2.bf16.msra.mxu0 %v377
    %488 = vmatprep.subr.bf16.mxu0 0
    %489 = vmatpush2.bf16.msra.mxu0 %v376
    %490 = vmatprep.subr.bf16.mxu0 0
    %491 = vmatpush2.bf16.msra.mxu0 %v375
    %492 = vmatprep.subr.bf16.mxu0 0
    %493 = vmatpush2.bf16.msra.mxu0 %v374
    %494 = vmatprep.subr.bf16.mxu0 0
    %495 = vmatpush2.bf16.msra.mxu0 %v373
    %496 = vmatprep.subr.bf16.mxu0 0
    %497 = vmatpush2.bf16.msra.mxu0 %v372
    %498 = vmatprep.mubr.bf16.mxu0 %v156
    %499 = vmatmul.mubr.bf16.gmra.mxu0 %v155
    %v500 = vpop.f32.mrf.mxu0
    %v501 = vadd.f32 %v142, %v500
    %v502 = vpop.f32.mrf.mxu0
    %v503 = vpop.f32.mrf.mxu0
    %v504 = vpop.f32.mrf.mxu0
    %505 = vdwg.mxu0
    %506 = vmatprep.subr.bf16.mxu0 0
    %507 = vmatpush1.bf16.msra.mxu0 %v387
    %508 = vmatprep.subr.bf16.mxu0 0
    %509 = vmatpush1.bf16.msra.mxu0 %v386
    %510 = vmatprep.subr.bf16.mxu0 0
    %511 = vmatpush1.bf16.msra.mxu0 %v385
    %512 = vmatprep.subr.bf16.mxu0 0
    %513 = vmatpush1.bf16.msra.mxu0 %v384
    %514 = vmatprep.subr.bf16.mxu0 0
    %515 = vmatpush1.bf16.msra.mxu0 %v383
    %516 = vmatprep.subr.bf16.mxu0 0
    %517 = vmatpush1.bf16.msra.mxu0 %v382
    %518 = vmatprep.subr.bf16.mxu0 0
    %519 = vmatpush1.bf16.msra.mxu0 %v381
    %520 = vmatprep.subr.bf16.mxu0 0
    %521 = vmatpush1.bf16.msra.mxu0 %v380
    %522 = vmatprep.subr.bf16.mxu0 0
    %523 = vmatpush2.bf16.msra.mxu0 %v395
    %524 = vmatprep.subr.bf16.mxu0 0
    %525 = vmatpush2.bf16.msra.mxu0 %v394
    %526 = vmatprep.subr.bf16.mxu0 0
    %527 = vmatpush2.bf16.msra.mxu0 %v393
    %528 = vmatprep.subr.bf16.mxu0 0
    %529 = vmatpush2.bf16.msra.mxu0 %v392
    %530 = vmatprep.subr.bf16.mxu0 0
    %531 = vmatpush2.bf16.msra.mxu0 %v391
    %532 = vmatprep.subr.bf16.mxu0 0
    %533 = vmatpush2.bf16.msra.mxu0 %v390
    %534 = vmatprep.subr.bf16.mxu0 0
    %535 = vmatpush2.bf16.msra.mxu0 %v389
    %536 = vmatprep.subr.bf16.mxu0 0
    %537 = vmatpush2.bf16.msra.mxu0 %v388
    %538 = vmatprep.mubr.bf16.mxu0 %v158
    %539 = vmatmul.mubr.bf16.gmra.mxu0 %v157
    %v540 = vpop.f32.mrf.mxu0
    %v541 = vadd.f32 %v501, %v540
    %v542 = vpop.f32.mrf.mxu0
    %v543 = vpop.f32.mrf.mxu0
    %v544 = vpop.f32.mrf.mxu0
    %545 = vdwg.mxu0
    %546 = vmatprep.subr.bf16.mxu0 0
    %547 = vmatpush1.bf16.msra.mxu0 %v403
    %548 = vmatprep.subr.bf16.mxu0 0
    %549 = vmatpush1.bf16.msra.mxu0 %v402
    %550 = vmatprep.subr.bf16.mxu0 0
    %551 = vmatpush1.bf16.msra.mxu0 %v401
    %552 = vmatprep.subr.bf16.mxu0 0
    %553 = vmatpush1.bf16.msra.mxu0 %v400
    %554 = vmatprep.subr.bf16.mxu0 0
    %555 = vmatpush1.bf16.msra.mxu0 %v399
    %556 = vmatprep.subr.bf16.mxu0 0
    %557 = vmatpush1.bf16.msra.mxu0 %v398
    %558 = vmatprep.subr.bf16.mxu0 0
    %559 = vmatpush1.bf16.msra.mxu0 %v397
    %560 = vmatprep.subr.bf16.mxu0 0
    %561 = vmatpush1.bf16.msra.mxu0 %v396
    %562 = vmatprep.subr.bf16.mxu0 0
    %563 = vmatpush2.bf16.msra.mxu0 %v411
    %564 = vmatprep.subr.bf16.mxu0 0
    %565 = vmatpush2.bf16.msra.mxu0 %v410
    %566 = vmatprep.subr.bf16.mxu0 0
    %567 = vmatpush2.bf16.msra.mxu0 %v409
    %568 = vmatprep.subr.bf16.mxu0 0
    %569 = vmatpush2.bf16.msra.mxu0 %v408
    %570 = vmatprep.subr.bf16.mxu0 0
    %571 = vmatpush2.bf16.msra.mxu0 %v407
    %572 = vmatprep.subr.bf16.mxu0 0
    %573 = vmatpush2.bf16.msra.mxu0 %v406
    %574 = vmatprep.subr.bf16.mxu0 0
    %575 = vmatpush2.bf16.msra.mxu0 %v405
    %576 = vmatprep.subr.bf16.mxu0 0
    %577 = vmatpush2.bf16.msra.mxu0 %v404
    %578 = vmatprep.mubr.bf16.mxu0 %v160
    %579 = vmatmul.mubr.bf16.gmra.mxu0 %v159
    %v580 = vpop.f32.mrf.mxu0
    %v581 = vadd.f32 %v541, %v580
    %v582 = vpop.f32.mrf.mxu0
    %v583 = vpop.f32.mrf.mxu0
    %v584 = vpop.f32.mrf.mxu0
    %585 = vdwg.mxu0
    %586 = vmatprep.subr.bf16.mxu0 0
    %587 = vmatpush1.bf16.msra.mxu0 0
    %588 = vmatprep.subr.bf16.mxu0 0
    %589 = vmatpush1.bf16.msra.mxu0 0
    %590 = vmatprep.subr.bf16.mxu0 0
    %591 = vmatpush1.bf16.msra.mxu0 0
    %592 = vmatprep.subr.bf16.mxu0 0
    %593 = vmatpush1.bf16.msra.mxu0 0
    %594 = vmatprep.subr.bf16.mxu0 0
    %595 = vmatpush1.bf16.msra.mxu0 0
    %596 = vmatprep.subr.bf16.mxu0 0
    %597 = vmatpush1.bf16.msra.mxu0 0
    %598 = vmatprep.subr.bf16.mxu0 0
    %599 = vmatpush1.bf16.msra.mxu0 0
    %600 = vmatprep.subr.bf16.mxu0 0
    %601 = vmatpush1.bf16.msra.mxu0 %v412
    %602 = vmatprep.subr.bf16.mxu0 0
    %603 = vmatpush2.bf16.msra.mxu0 0
    %604 = vmatprep.subr.bf16.mxu0 0
    %605 = vmatpush2.bf16.msra.mxu0 0
    %606 = vmatprep.subr.bf16.mxu0 0
    %607 = vmatpush2.bf16.msra.mxu0 0
    %608 = vmatprep.subr.bf16.mxu0 0
    %609 = vmatpush2.bf16.msra.mxu0 0
    %610 = vmatprep.subr.bf16.mxu0 0
    %611 = vmatpush2.bf16.msra.mxu0 0
    %612 = vmatprep.subr.bf16.mxu0 0
    %613 = vmatpush2.bf16.msra.mxu0 0
    %614 = vmatprep.subr.bf16.mxu0 0
    %615 = vmatpush2.bf16.msra.mxu0 0
    %616 = vmatprep.subr.bf16.mxu0 0
    %617 = vmatpush2.bf16.msra.mxu0 0
    %618 = vmatprep.mubr.bf16.mxu0 0
    %619 = vmatmul.mubr.bf16.gmra.mxu0 %v464
    %v620 = vpop.f32.mrf.mxu0
    %v621 = vadd.f32 %v581, %v620
    %v622 = vpop.f32.mrf.mxu0
    %v623 = vpop.f32.mrf.mxu0
    %v624 = vpop.f32.mrf.mxu0
    %625 = vdwg.mxu0
    %v626 = vmax.f32 %v621, 0.0
    %v627 = vpack.c.bf16 %v626, %v626
    %v628 = vld [vmem:[%s3] sm:$0xf]
    %v629 = vld [vmem:[%s3 + $0x4] sm:$0xf]
    %v630 = vld [vmem:[%s3 + $0x8] sm:$0xf]
    %v631 = vld [vmem:[%s3 + $0xc] sm:$0xf]
    %v632 = vld [vmem:[%s3 + $0x10] sm:$0xf]
    %v633 = vld [vmem:[%s3 + $0x14] sm:$0xf]
    %v634 = vld [vmem:[%s3 + $0x18] sm:$0xf]
    %v635 = vld [vmem:[%s3 + $0x1c] sm:$0xf]
    %v636 = vld [vmem:[%s3 + $0x20] sm:$0xf]
    %v637 = vld [vmem:[%s3 + $0x24] sm:$0xf]
    %v638 = vld [vmem:[%s3 + $0x28] sm:$0xf]
    %v639 = vld [vmem:[%s3 + $0x2c] sm:$0xf]
    %v640 = vld [vmem:[%s3 + $0x30] sm:$0xf]
    %v641 = vld [vmem:[%s3 + $0x34] sm:$0xf]
    %v642 = vld [vmem:[%s3 + $0x38] sm:$0xf]
    %v643 = vld [vmem:[%s3 + $0x3c] sm:$0xf]
    %v644 = vld [vmem:[%s4] sm:$0x1]
    %v646 = vlaneseq
    %v647 = vshrl.u32 %v646, 7
    %v648 = vsub.s32 0, %v647
    %v649 = vrot.slane %v644, %v648
    %v667 = vunpack.c.l.b16 %v628
    %v668 = vunpack.c.l.b16 %v629
    %v669 = vunpack.c.l.b16 %v630
    %v670 = vunpack.c.l.b16 %v631
    %v671 = vunpack.c.l.b16 %v632
    %v672 = vunpack.c.l.b16 %v633
    %v673 = vunpack.c.l.b16 %v634
    %v674 = vunpack.c.l.b16 %v635
    %v675 = vunpack.c.l.b16 %v636
    %v676 = vunpack.c.l.b16 %v637
    %v677 = vunpack.c.l.b16 %v638
    %v678 = vunpack.c.l.b16 %v639
    %v679 = vunpack.c.l.b16 %v640
    %v680 = vunpack.c.l.b16 %v641
    %v681 = vunpack.c.l.b16 %v642
    %v682 = vunpack.c.l.b16 %v643
    %v683 = vpack.c.b16 %v668, %v667
    %v684 = vpack.c.b16 %v670, %v669
    %v685 = vpack.c.b16 %v672, %v671
    %v686 = vpack.c.b16 %v674, %v673
    %v687 = vpack.c.b16 %v676, %v675
    %v688 = vpack.c.b16 %v678, %v677
    %v689 = vpack.c.b16 %v680, %v679
    %v690 = vpack.c.b16 %v682, %v681
    %699 = vmatprep.subr.bf16.mxu0 0
    %700 = vmatpush1.bf16.msra.mxu0 %v690
    %701 = vmatprep.subr.bf16.mxu0 0
    %702 = vmatpush1.bf16.msra.mxu0 %v689
    %703 = vmatprep.subr.bf16.mxu0 0
    %704 = vmatpush1.bf16.msra.mxu0 %v688
    %705 = vmatprep.subr.bf16.mxu0 0
    %706 = vmatpush1.bf16.msra.mxu0 %v687
    %707 = vmatprep.subr.bf16.mxu0 0
    %708 = vmatpush1.bf16.msra.mxu0 %v686
    %709 = vmatprep.subr.bf16.mxu0 0
    %710 = vmatpush1.bf16.msra.mxu0 %v685
    %711 = vmatprep.subr.bf16.mxu0 0
    %712 = vmatpush1.bf16.msra.mxu0 %v684
    %713 = vmatprep.subr.bf16.mxu0 0
    %714 = vmatpush1.bf16.msra.mxu0 %v683
    %715 = vmatprep.subr.bf16.mxu0 0
    %716 = vmatpush2.bf16.msra.mxu0 0
    %717 = vmatprep.subr.bf16.mxu0 0
    %718 = vmatpush2.bf16.msra.mxu0 0
    %719 = vmatprep.subr.bf16.mxu0 0
    %720 = vmatpush2.bf16.msra.mxu0 0
    %721 = vmatprep.subr.bf16.mxu0 0
    %722 = vmatpush2.bf16.msra.mxu0 0
    %723 = vmatprep.subr.bf16.mxu0 0
    %724 = vmatpush2.bf16.msra.mxu0 0
    %725 = vmatprep.subr.bf16.mxu0 0
    %726 = vmatpush2.bf16.msra.mxu0 0
    %727 = vmatprep.subr.bf16.mxu0 0
    %728 = vmatpush2.bf16.msra.mxu0 0
    %729 = vmatprep.subr.bf16.mxu0 0
    %730 = vmatpush2.bf16.msra.mxu0 0
    %731 = vmatprep.mubr.bf16.mxu0 0
    %732 = vmatmul.mubr.bf16.gmra.mxu0 %v627
    %v733 = vpop.f32.mrf.mxu0
    %v734 = vadd.f32 %v649, %v733
    %v735 = vpop.f32.mrf.mxu0
    %v736 = vpop.f32.mrf.mxu0
    %v737 = vpop.f32.mrf.mxu0
    %738 = vdwg.mxu0
    %vm739 = vcmask 80896
    %v740 = vsel %vm739, %v734, -inf
    %741 = vmax.xlane.f32.xlu0 %v740
    %v742 = vpop.xlane.xlu0 %741
    %v743 = vsub.f32 %v734, %v742
    %v744 = vmul.f32 %v743, 1.442695
    %v745 = vpow.pop %v744
    %v746 = vsel %vm739, %v745, 0.0
    %747 = vadd.xlane.f32.xlu0 %v746
    %v748 = vpop.xlane.xlu0 %747
    %v749 = vlog2.pop %v748
    %v750 = vmul.f32 %v749, 0.6931472
    %v751 = vsub.f32 %v743, %v750
    %752 = vst.msk [vmem:[%s5] sm:$0xff] %vm739, %v751
    // Predicated region
    $region26: #{dnn_fedsi_forward.1} parent=1 // pred_check
      _
    $region27: #{dnn_fedsi_forward.1} parent=1 // pred_check_branch
      %754 = sbr.rel (0) target = $region29
    $region28: #{dnn_fedsi_forward.1} parent=1 // pred_region
      _
    $region29: #{dnn_fedsi_forward.1} parent=1 // pred_fallthru
      _
    // Predicated region
    $region30: #{dnn_fedsi_forward.1} parent=1 // pred_check
      _
    $region31: #{dnn_fedsi_forward.1} parent=1 // pred_check_branch
      %756 = sbr.rel (0) target = $region33
    $region32: #{dnn_fedsi_forward.1} parent=1 // pred_region
      _
    $region33: #{dnn_fedsi_forward.1} parent=1 // pred_fallthru
      _
    %757 = vsyncpa [#allocation3], 1

</llo_original>
